<compile_context>
chip_gen: v7x
topology: tpu7x:2x2x1
jax: 0.10.0
libtpu: 0.0.40
codegen_flags: <defaults>
</compile_context>

<pallas_src>
import jax
import jax.numpy as jnp
from jax.experimental import pallas as pl
from jax.experimental.pallas import tpu as pltpu  # noqa: F401  (not required for this tiny kernel)

STATE_SPACE = 4    # e.g. CartPole-v1 observation_space.shape[0]
HIDDEN = 20        # nn.Linear(state_space, 20)
ACTION_SPACE = 2   # e.g. CartPole-v1 action_space.n
BATCH = 2


def _round_up(n, m):
    return ((n + m - 1) // m) * m


def pack_params(w1, b1, w2, b2):
    """One-time (init-time) packing of PyTorch-layout Linear params into a
    single lane-aligned f32 slab.  Layout (rows x 128 lanes):

        rows [0, S)            cols [0, H)   : W1^T   (S, H)
        row  S                 cols [0, H)   : b1     (1, H)
        rows [w2_row, w2_row+H) cols [0, A)  : W2^T   (H, A)
        row  b2_row            cols [0, A)   : b2     (1, A)
    """
    H, S = w1.shape
    A = w2.shape[0]
    w2_row = _round_up(S + 1, 8)
    b2_row = w2_row + H
    rows = _round_up(b2_row + 1, 8)
    cols = _round_up(max(H, A), 128)

    slab = jnp.zeros((rows, cols), jnp.float32)
    slab = slab.at[0:S, 0:H].set(jnp.transpose(w1).astype(jnp.float32))
    slab = slab.at[S, 0:H].set(b1.astype(jnp.float32))
    slab = slab.at[w2_row:w2_row + H, 0:A].set(jnp.transpose(w2).astype(jnp.float32))
    slab = slab.at[b2_row, 0:A].set(b2.astype(jnp.float32))

    layout = (S, H, A, w2_row, b2_row)
    return slab, layout


def make_policy_kernel(S, H, A, w2_row, b2_row):
    def policy_kernel(x_ref, p_ref, o_ref):
        # ---- fc1 + ReLU -----------------------------------------------------
        x = x_ref[...]                                           # (B, S) f32
        w1 = p_ref[0:S, 0:H]                                     # (S, H) static view
        b1 = p_ref[S:S + 1, 0:H]                                 # (1, H)
        h = jnp.dot(x, w1, preferred_element_type=jnp.float32)   # (B, H) on MXU
        h = jnp.maximum(h + b1, 0.0)                             # ReLU

        # ---- fc3 ------------------------------------------------------------
        w2 = p_ref[w2_row:w2_row + H, 0:A]                       # (H, A)
        b2 = p_ref[b2_row:b2_row + 1, 0:A]                       # (1, A)
        logits = jnp.dot(h, w2, preferred_element_type=jnp.float32) + b2  # (B, A)

        # ---- softmax along dim=1 --------------------------------------------
        if A == 2:
            # Exact 2-class closed form: softmax([l0, l1]) = [sigmoid(l0-l1), 1-...]
            # -> one EUP exp, no cross-lane XLU reduce.
            d = logits[:, 0:1] - logits[:, 1:2]                  # (B, 1)
            p0 = 1.0 / (1.0 + jnp.exp(-d))                       # (B, 1)
            o_ref[...] = jnp.concatenate([p0, 1.0 - p0], axis=1)
        else:
            # Generic numerically-stable softmax.
            m = jnp.max(logits, axis=1, keepdims=True)
            e = jnp.exp(logits - m)
            denom = jnp.sum(e, axis=1, keepdims=True)
            o_ref[...] = e / denom

    return policy_kernel


def policy_forward(x, param_slab, layout):
    """x: (B, S) float32.  param_slab/layout from pack_params() (built once)."""
    S, H, A, w2_row, b2_row = layout
    B = x.shape[0]

    full = lambda shape: pl.BlockSpec(shape, lambda: (0,) * len(shape))

    return pl.pallas_call(
        make_policy_kernel(S, H, A, w2_row, b2_row),
        out_shape=jax.ShapeDtypeStruct((B, A), jnp.float32),
        grid=(),
        in_specs=[full(x.shape), full(param_slab.shape)],
        out_specs=full((B, A)),
    )(x, param_slab)


def reference_forward(x, w1, b1, w2, b2):
    h = jnp.maximum(x @ w1.T + b1, 0.0)
    logits = h @ w2.T + b2
    return jax.nn.softmax(logits, axis=1)


if __name__ == "__main__":
    key = jax.random.PRNGKey(0)
    kx, k1, k2, k3, k4 = jax.random.split(key, 5)

    # Deterministic synthetic parameters (PyTorch nn.Linear shapes: (out, in)).
    x = jax.random.normal(kx, (BATCH, STATE_SPACE), dtype=jnp.float32)
    w1 = jax.random.normal(k1, (HIDDEN, STATE_SPACE), dtype=jnp.float32) * 0.1
    b1 = jax.random.normal(k2, (HIDDEN,), dtype=jnp.float32) * 0.1
    w2 = jax.random.normal(k3, (ACTION_SPACE, HIDDEN), dtype=jnp.float32) * 0.1
    b2 = jax.random.normal(k4, (ACTION_SPACE,), dtype=jnp.float32) * 0.1

    # One-time packing (would live at Policy.__init__ time in a rollout loop).
    param_slab, layout = pack_params(w1, b1, w2, b2)
    param_slab = jax.block_until_ready(param_slab)

    out = policy_forward(x, param_slab, layout)
    out = jax.block_until_ready(out)

    ref = reference_forward(x, w1, b1, w2, b2)
    assert out.shape == (BATCH, ACTION_SPACE)
    assert jnp.allclose(out, ref, atol=1e-5, rtol=1e-5), (out, ref)
    # probabilities must sum to 1 along dim=1
    assert jnp.allclose(jnp.sum(out, axis=1), 1.0, atol=1e-5)

    print("KERNEL_OK")
</pallas_src>

<mosaic_0001>
module attributes {stable_mosaic.version = 11 : i64} {
  func.func @policy_kernel(%arg0: memref<2x4xf32, #tpu.memory_space<vmem>>, %arg1: memref<32x128xf32, #tpu.memory_space<vmem>>, %arg2: memref<2x2xf32, #tpu.memory_space<vmem>>) attributes {dimension_semantics = [], scalar_prefetch = 0 : i64, scratch_operands = 0 : i64, tpu.core_type = #tpu.core_type<tc>} {
    %c0 = arith.constant 0 : index
    %c0_0 = arith.constant 0 : index
    %0 = vector.load %arg0[%c0, %c0_0] : memref<2x4xf32, #tpu.memory_space<vmem>>, vector<2x4xf32>
    %c0_1 = arith.constant 0 : index
    %c0_2 = arith.constant 0 : index
    %1 = vector.load %arg1[%c0_1, %c0_2] : memref<32x128xf32, #tpu.memory_space<vmem>>, vector<4x20xf32>
    %c4 = arith.constant 4 : index
    %c0_3 = arith.constant 0 : index
    %2 = vector.load %arg1[%c4, %c0_3] : memref<32x128xf32, #tpu.memory_space<vmem>>, vector<1x20xf32>
    %cst = arith.constant dense<0.000000e+00> : vector<2x20xf32>
    %3 = tpu.matmul %0, %1, %cst {dimension_numbers = #tpu.dot_dimension_numbers<[1], [0], [0], [1], [0, 0, 1, 1], [], []>} : vector<2x4xf32>, vector<4x20xf32>, vector<2x20xf32> -> vector<2x20xf32>
    %4 = vector.broadcast %2 : vector<1x20xf32> to vector<2x20xf32>
    %5 = arith.addf %3, %4 : vector<2x20xf32>
    %cst_4 = arith.constant 0.000000e+00 : f32
    %6 = vector.broadcast %cst_4 : f32 to vector<2x20xf32>
    %7 = arith.maximumf %5, %6 : vector<2x20xf32>
    %c8 = arith.constant 8 : index
    %c0_5 = arith.constant 0 : index
    %8 = vector.load %arg1[%c8, %c0_5] : memref<32x128xf32, #tpu.memory_space<vmem>>, vector<20x2xf32>
    %c28 = arith.constant 28 : index
    %c0_6 = arith.constant 0 : index
    %9 = vector.load %arg1[%c28, %c0_6] : memref<32x128xf32, #tpu.memory_space<vmem>>, vector<1x2xf32>
    %cst_7 = arith.constant dense<0.000000e+00> : vector<2x2xf32>
    %10 = tpu.matmul %7, %8, %cst_7 {dimension_numbers = #tpu.dot_dimension_numbers<[1], [0], [0], [1], [0, 0, 1, 1], [], []>} : vector<2x20xf32>, vector<20x2xf32>, vector<2x2xf32> -> vector<2x2xf32>
    %11 = vector.broadcast %9 : vector<1x2xf32> to vector<2x2xf32>
    %12 = arith.addf %10, %11 : vector<2x2xf32>
    %13 = vector.extract_strided_slice %12 {offsets = [0, 0], sizes = [2, 1], strides = [1, 1]} : vector<2x2xf32> to vector<2x1xf32>
    %14 = vector.extract_strided_slice %12 {offsets = [0, 1], sizes = [2, 1], strides = [1, 1]} : vector<2x2xf32> to vector<2x1xf32>
    %15 = arith.subf %13, %14 : vector<2x1xf32>
    %cst_8 = arith.constant 0.000000e+00 : f32
    %16 = vector.broadcast %cst_8 : f32 to vector<2x1xf32>
    %17 = arith.subf %16, %15 : vector<2x1xf32>
    %18 = math.exp %17 : vector<2x1xf32>
    %cst_9 = arith.constant 1.000000e+00 : f32
    %19 = vector.broadcast %cst_9 : f32 to vector<2x1xf32>
    %20 = arith.addf %19, %18 : vector<2x1xf32>
    %cst_10 = arith.constant 1.000000e+00 : f32
    %21 = vector.broadcast %cst_10 : f32 to vector<2x1xf32>
    %22 = arith.divf %21, %20 : vector<2x1xf32>
    %cst_11 = arith.constant 1.000000e+00 : f32
    %23 = vector.broadcast %cst_11 : f32 to vector<2x1xf32>
    %24 = arith.subf %23, %22 : vector<2x1xf32>
    %25 = tpu.concatenate %22, %24 in 1 : vector<2x1xf32>, vector<2x1xf32> -> vector<2x2xf32>
    %c0_12 = arith.constant 0 : index
    %c0_13 = arith.constant 0 : index
    %26 = vector.load %arg2[%c0_12, %c0_13] : memref<2x2xf32, #tpu.memory_space<vmem>>, vector<2x2xf32>
    tpu.vector_store %arg2[%c0_12, %c0_13], %25 {strides = array<i32>} : memref<2x2xf32, #tpu.memory_space<vmem>>, vector<2x2xf32>,
    return
  }
}

</mosaic_0001>

<llo_original>
// kernel: tpu_custom_call.1
$region0: #{tpu_custom_call.1}
  #allocation0 [shape = 'u32[]', space=smem, size = 0x4, offset = 0x4, fixed_abs, tag = 'smem constant byte address 0x4 - core index']
  #allocation1 [shape = 'u32[144,128]{1,0:T(1,128)}', space=vmem, size = 0x12000, scoped, tag = 'internal scratch']
  %s0 = inlined_call_operand.hbm [shape: f32[2,4], index: 0, kind: input, shape index: {}]
  %s1 = inlined_call_operand.hbm [shape: f32[32,128], index: 1, kind: input, shape index: {}]
  %s2 = inlined_call_operand.hbm [shape: f32[2,2], index: 2, kind: output, shape index: {}]
  %s3 = sld [smem:[#allocation0]]
  $region26: #{tpu_custom_call.1} parent=0
    _
  %s5 = ssub.s32 1, %s3
  %s6 = scalar_select 0, %s5, %s3
  $region1: #{tpu_custom_call.1} parent=0
    #allocation2 [shape = 'u8[1024]{0}', space=vmem, size = 0x400, scoped, tag = 'input window, operand 0, single buffered']
    #allocation3 [shape = 's32[1]{0}', space=sflag, size = 0x4, scoped, tag = 'scoped memory for tpu_custom_call.1']
    #allocation4 [shape = 's32[1]{0}', space=sflag, size = 0x4, scoped, tag = 'scoped memory for tpu_custom_call.1']
    #allocation5 [shape = 'u8[16384]{0}', space=vmem, size = 0x4000, scoped, tag = 'input window, operand 1, single buffered']
    #allocation6 [shape = 's32[1]{0}', space=sflag, size = 0x4, scoped, tag = 'scoped memory for tpu_custom_call.1']
    #allocation7 [shape = 'u8[1024]{0}', space=vmem, size = 0x400, scoped, tag = 'output window, operand 0, single buffered']
    %7 = vsyncpa [#allocation3], 0
    %8 = vsyncpa [#allocation6], 0
    %9 = vsyncpa [#allocation4], 0
    // Predicated region
    $region2: #{tpu_custom_call.1} parent=1 // pred_check
      _
    $region3: #{tpu_custom_call.1} parent=1 // pred_check_branch
      %11 = sbr.rel (0) target = $region5
    $region4: #{tpu_custom_call.1} parent=1 // pred_region
      %s13 = ssub.s32 32, 32
      %14 = vsyncadd [#allocation3], %s13
      %s16 = sshll.u32 [#allocation2], 4
      %s17 = int_to_ptr.vmem [resolvable:$true] %s16
      %19 = dma.hbm_to_vmem [thread:$0]  %s0, 32, %s17, [#allocation3]
    $region5: #{tpu_custom_call.1} parent=1 // pred_fallthru
      _
    // Predicated region
    $region6: #{tpu_custom_call.1} parent=1 // pred_check
      _
    $region7: #{tpu_custom_call.1} parent=1 // pred_check_branch
      %21 = sbr.rel (0) target = $region9
    $region8: #{tpu_custom_call.1} parent=1 // pred_region
      %s23 = ssub.s32 512, 512
      %24 = vsyncadd [#allocation6], %s23
      %s25 = sshll.u32 [#allocation5], 4
      %s26 = int_to_ptr.vmem [resolvable:$true] %s25
      %31 = dma.hbm_to_vmem [thread:$0]  %s1, 512, %s26, [#allocation6], 128, 128, 8
    $region9: #{tpu_custom_call.1} parent=1 // pred_fallthru
      _
    // Predicated region
    $region10: #{tpu_custom_call.1} parent=1 // pred_check
      _
    $region11: #{tpu_custom_call.1} parent=1 // pred_check_branch
      %33 = sbr.rel (0) target = $region13
    $region12: #{tpu_custom_call.1} parent=1 // pred_region
      %34 = dma.done [#allocation3], 32
    $region13: #{tpu_custom_call.1} parent=1 // pred_fallthru
      _
    // Predicated region
    $region14: #{tpu_custom_call.1} parent=1 // pred_check
      _
    $region15: #{tpu_custom_call.1} parent=1 // pred_check_branch
      %36 = sbr.rel (0) target = $region17
    $region16: #{tpu_custom_call.1} parent=1 // pred_region
      %37 = dma.done [#allocation6], 512
    $region17: #{tpu_custom_call.1} parent=1 // pred_fallthru
      _
    %v38 = vld [vmem:[#allocation2] sm:$0x3]
    %v39 = vld [vmem:[#allocation5] sm:$0xf]
    %v40 = vld [vmem:[#allocation5 + $0x4] sm:$0x1]
    %v41 = vlaneseq
    %v42 = vshrl.u32 %v41, 7
    %v43 = vsub.s32 0, %v42
    %v44 = vrot.slane %v40, %v43
    %vm45 = vcmask 31744
    %v47 = vsel %vm45, %v38, 0
    %vm49 = vcmask 1043456
    %v51 = vsel %vm49, %v39, 0
    %53 = vmatprep.subr.mxu0 0.0
    %54 = vmatpush1.msra.mxu0 %v51
    %55 = vmatprep.subr.mxu0 0.0
    %56 = vmatpush1.msra.mxu0 0.0
    %57 = vmatprep.subr.mxu0 0.0
    %58 = vmatpush1.msra.mxu0 0.0
    %59 = vmatprep.subr.mxu0 0.0
    %60 = vmatpush1.msra.mxu0 0.0
    %61 = vmatprep.subr.mxu0 0.0
    %62 = vmatpush1.msra.mxu0 0.0
    %63 = vmatprep.subr.mxu0 0.0
    %64 = vmatpush1.msra.mxu0 0.0
    %65 = vmatprep.subr.mxu0 0.0
    %66 = vmatpush1.msra.mxu0 0.0
    %67 = vmatprep.subr.mxu0 0.0
    %68 = vmatpush1.msra.mxu0 0.0
    %69 = vmatprep.subr.mxu0 0.0
    %70 = vmatpush1.msra.mxu0 0.0
    %71 = vmatprep.subr.mxu0 0.0
    %72 = vmatpush1.msra.mxu0 0.0
    %73 = vmatprep.subr.mxu0 0.0
    %74 = vmatpush1.msra.mxu0 0.0
    %75 = vmatprep.subr.mxu0 0.0
    %76 = vmatpush1.msra.mxu0 0.0
    %77 = vmatprep.subr.mxu0 0.0
    %78 = vmatpush1.msra.mxu0 0.0
    %79 = vmatprep.subr.mxu0 0.0
    %80 = vmatpush1.msra.mxu0 0.0
    %81 = vmatprep.subr.mxu0 0.0
    %82 = vmatpush1.msra.mxu0 0.0
    %83 = vmatprep.subr.mxu0 0.0
    %84 = vmatpush1.msra.mxu0 0.0
    %85 = vmatprep.subr.mxu0 0.0
    %86 = vmatpush1.msra.mxu0 0.0
    %87 = vmatprep.subr.mxu0 0.0
    %88 = vmatpush1.msra.mxu0 0.0
    %89 = vmatprep.subr.mxu0 0.0
    %90 = vmatpush1.msra.mxu0 0.0
    %91 = vmatprep.subr.mxu0 0.0
    %92 = vmatpush1.msra.mxu0 0.0
    %93 = vmatprep.subr.mxu0 0.0
    %94 = vmatpush1.msra.mxu0 0.0
    %95 = vmatprep.subr.mxu0 0.0
    %96 = vmatpush1.msra.mxu0 0.0
    %97 = vmatprep.subr.mxu0 0.0
    %98 = vmatpush1.msra.mxu0 0.0
    %99 = vmatprep.subr.mxu0 0.0
    %100 = vmatpush1.msra.mxu0 0.0
    %101 = vmatprep.subr.mxu0 0.0
    %102 = vmatpush1.msra.mxu0 0.0
    %103 = vmatprep.subr.mxu0 0.0
    %104 = vmatpush1.msra.mxu0 0.0
    %105 = vmatprep.subr.mxu0 0.0
    %106 = vmatpush1.msra.mxu0 0.0
    %107 = vmatprep.subr.mxu0 0.0
    %108 = vmatpush1.msra.mxu0 0.0
    %109 = vmatprep.subr.mxu0 0.0
    %110 = vmatpush1.msra.mxu0 0.0
    %111 = vmatprep.subr.mxu0 0.0
    %112 = vmatpush1.msra.mxu0 0.0
    %113 = vmatprep.subr.mxu0 0.0
    %114 = vmatpush1.msra.mxu0 0.0
    %115 = vmatprep.subr.mxu0 0.0
    %116 = vmatpush1.msra.mxu0 0.0
    %117 = vmatprep.mubr.f32.mxu0 0.0
    %118 = vmatmul.mubr.f32.gmra.mrb[0].mxu0 %v47
    %v119 = vpop.f32.mrb[0].mxu0
    %v120 = vadd.f32 %v44, %v119
    %v121 = vpop.f32.mrb[0].mxu0
    %122 = vdwg.mxu0
    %v123 = vmax.f32 %v120, 0.0
    %v124 = vld [vmem:[#allocation5 + $0x8] sm:$0xff]
    %v125 = vld [vmem:[#allocation5 + $0x10] sm:$0xff]
    %v126 = vld [vmem:[#allocation5 + $0x18] sm:$0xf]
    %v127 = vld [vmem:[#allocation5 + $0x1c] sm:$0x1]
    %v128 = vlaneseq
    %v129 = vshrl.u32 %v128, 7
    %v130 = vsub.s32 0, %v129
    %v131 = vrot.slane %v127, %v130
    %vm132 = vcmask 162816
    %v134 = vsel %vm132, %v123, 0
    %v137 = vsel %vm49, %v126, 0
    %139 = vmatprep.subr.mxu0 0.0
    %140 = vmatpush1.msra.mxu0 %v124
    %141 = vmatprep.subr.mxu0 0.0
    %142 = vmatpush1.msra.mxu0 %v125
    %143 = vmatprep.subr.mxu0 0.0
    %144 = vmatpush1.msra.mxu0 %v137
    %145 = vmatprep.subr.mxu0 0.0
    %146 = vmatpush1.msra.mxu0 0.0
    %147 = vmatprep.subr.mxu0 0.0
    %148 = vmatpush1.msra.mxu0 0.0
    %149 = vmatprep.subr.mxu0 0.0
    %150 = vmatpush1.msra.mxu0 0.0
    %151 = vmatprep.subr.mxu0 0.0
    %152 = vmatpush1.msra.mxu0 0.0
    %153 = vmatprep.subr.mxu0 0.0
    %154 = vmatpush1.msra.mxu0 0.0
    %155 = vmatprep.subr.mxu0 0.0
    %156 = vmatpush1.msra.mxu0 0.0
    %157 = vmatprep.subr.mxu0 0.0
    %158 = vmatpush1.msra.mxu0 0.0
    %159 = vmatprep.subr.mxu0 0.0
    %160 = vmatpush1.msra.mxu0 0.0
    %161 = vmatprep.subr.mxu0 0.0
    %162 = vmatpush1.msra.mxu0 0.0
    %163 = vmatprep.subr.mxu0 0.0
    %164 = vmatpush1.msra.mxu0 0.0
    %165 = vmatprep.subr.mxu0 0.0
    %166 = vmatpush1.msra.mxu0 0.0
    %167 = vmatprep.subr.mxu0 0.0
    %168 = vmatpush1.msra.mxu0 0.0
    %169 = vmatprep.subr.mxu0 0.0
    %170 = vmatpush1.msra.mxu0 0.0
    %171 = vmatprep.subr.mxu0 0.0
    %172 = vmatpush1.msra.mxu0 0.0
    %173 = vmatprep.subr.mxu0 0.0
    %174 = vmatpush1.msra.mxu0 0.0
    %175 = vmatprep.subr.mxu0 0.0
    %176 = vmatpush1.msra.mxu0 0.0
    %177 = vmatprep.subr.mxu0 0.0
    %178 = vmatpush1.msra.mxu0 0.0
    %179 = vmatprep.subr.mxu0 0.0
    %180 = vmatpush1.msra.mxu0 0.0
    %181 = vmatprep.subr.mxu0 0.0
    %182 = vmatpush1.msra.mxu0 0.0
    %183 = vmatprep.subr.mxu0 0.0
    %184 = vmatpush1.msra.mxu0 0.0
    %185 = vmatprep.subr.mxu0 0.0
    %186 = vmatpush1.msra.mxu0 0.0
    %187 = vmatprep.subr.mxu0 0.0
    %188 = vmatpush1.msra.mxu0 0.0
    %189 = vmatprep.subr.mxu0 0.0
    %190 = vmatpush1.msra.mxu0 0.0
    %191 = vmatprep.subr.mxu0 0.0
    %192 = vmatpush1.msra.mxu0 0.0
    %193 = vmatprep.subr.mxu0 0.0
    %194 = vmatpush1.msra.mxu0 0.0
    %195 = vmatprep.subr.mxu0 0.0
    %196 = vmatpush1.msra.mxu0 0.0
    %197 = vmatprep.subr.mxu0 0.0
    %198 = vmatpush1.msra.mxu0 0.0
    %199 = vmatprep.subr.mxu0 0.0
    %200 = vmatpush1.msra.mxu0 0.0
    %201 = vmatprep.subr.mxu0 0.0
    %202 = vmatpush1.msra.mxu0 0.0
    %203 = vmatprep.mubr.f32.mxu0 0.0
    %204 = vmatmul.mubr.f32.gmra.mrb[0].mxu0 %v134
    %v205 = vpop.f32.mrb[0].mxu0
    %v206 = vadd.f32 %v131, %v205
    %v207 = vpop.f32.mrb[0].mxu0
    %208 = vdwg.mxu0
    %210 = vrot.lane.b32.xlu0 %v206, 127
    %v211 = vpop.permute.xlu0 %210
    %v213 = vsub.f32 %v206, %v211
    %v214 = vsub.f32 0.0, %v213
    %v215 = vmul.f32 %v214, 1.442695
    %v216 = vpow.pop %v215
    %v217 = vadd.f32 %v216, 1.0
    %v218 = vrcp.pop %v217
    %v219 = vmul.f32 1.0, %v218
    %v220 = vsub.f32 1.0, %v219
    %222 = vrot.lane.b32.xlu0 %v220, 1
    %v223 = vpop.permute.xlu0 %222
    %vm225 = vcmask 7168
    %v226 = vsel %vm225, %v219, %v223
    %vm227 = vcmask 9216
    %228 = vst.msk [vmem:[#allocation7] sm:$0x3] %vm227, %v226
    // Predicated region
    $region18: #{tpu_custom_call.1} parent=1 // pred_check
      _
    $region19: #{tpu_custom_call.1} parent=1 // pred_check_branch
      %230 = sbr.rel (0) target = $region21
    $region20: #{tpu_custom_call.1} parent=1 // pred_region
      %s232 = ssub.s32 32, 32
      %233 = vsyncadd [#allocation4], %s232
      %s235 = sshll.u32 [#allocation7], 4
      %s236 = int_to_ptr.vmem [resolvable:$true] %s235
      %238 = dma.vmem_to_hbm [thread:$0]  %s236, 32, %s2, [#allocation4]
    $region21: #{tpu_custom_call.1} parent=1 // pred_fallthru
      _
    // Predicated region
    $region22: #{tpu_custom_call.1} parent=1 // pred_check
      _
    $region23: #{tpu_custom_call.1} parent=1 // pred_check_branch
      %240 = sbr.rel (0) target = $region25
    $region24: #{tpu_custom_call.1} parent=1 // pred_region
      %241 = dma.done [#allocation4], 32
    $region25: #{tpu_custom_call.1} parent=1 // pred_fallthru
      _
    %242 = vsyncpa [#allocation3], 1
    %243 = vsyncpa [#allocation6], 1
    %244 = vsyncpa [#allocation4], 1

</llo_original>
